<compile_context>
chip_gen: v6e
topology: v6e:2x2x1
jax: 0.10.0
libtpu: 0.0.40
codegen_flags: <defaults>
</compile_context>

<pallas_src>
import functools

import jax
import jax.numpy as jnp
import numpy as np
from jax.experimental import pallas as pl
from jax.experimental.pallas import tpu as pltpu


def _round_up(x, m):
    return ((x + m - 1) // m) * m


def _vmem_budget_bytes():
    """Unified VMEM budget: ~75% of this generation's physical capacity
    (48 MiB on v7x, 96 MiB on v5e/v6e); conservative 48 MiB fallback."""
    cap = 64 * 1024 * 1024
    try:
        cap = int(getattr(pltpu.get_tpu_info(), "vmem_capacity_bytes", cap)) or cap
    except Exception:
        cap = 64 * 1024 * 1024
    return int(cap * 3 // 4)


def _lane_multiple():
    """Feature-dim padding multiple: 256 matches the 256-wide MXU on v6e/v7x,
    128 matches v5e and older generations."""
    try:
        kind = jax.devices()[0].device_kind.lower()
    except Exception:
        return 128
    return 128 if any(t in kind for t in ("v2", "v3", "v4", "v5")) else 256


def _pick_k_tile(t_pad, h_pad, budget, step):
    """Largest K-slice of W1 (multiple of `step`, dividing t_pad) whose VMEM
    footprint stays under ~40% of the budget.  tk == t_pad -> single K step and
    W1 fully resident in one buffer; otherwise the slices are double-buffered."""
    limit = max(int(budget * 0.4), 2 * step * h_pad)
    if 2 * t_pad * h_pad <= limit:                    # single-buffered full W1
        return t_pad
    best = step
    tk = step
    while tk < t_pad:
        if t_pad % tk == 0 and 2 * 2 * tk * h_pad <= limit:
            best = tk
        tk += step
    return best


def _pick_tile_rows(n_rows, tk, h_pad, d_pad, budget, resident):
    """Row-tile size: multiple of 16 (bf16 sublane packing), sized so the streamed
    (double-buffered) tiles plus f32 temporaries fill the remaining VMEM budget."""
    avail = max(budget - resident, 1 << 20)
    per_row = max(
        # pass 1: x tile (bf16 x2 bufs) + h out tile (bf16 x2 bufs)
        #         + f32 accumulator scratch + f32 temporaries (h, h*h)
        4 * tk + 4 * h_pad + 4 * h_pad + 8 * h_pad,
        # pass 2: h tile (bf16 x2 bufs) + out tile (f32 x2 bufs) + f32 temps (h, e)
        4 * h_pad + 8 * d_pad + 8 * h_pad,
    )
    tile = (avail // per_row) // 16 * 16
    tile = int(max(16, min(512, tile)))               # 512 is the measured sweet spot
    return int(min(tile, _round_up(max(n_rows, 1), 16)))


def _resident_spec(block_shape, index_map):
    """BlockSpec for a grid-invariant operand: request a single VMEM buffer so the
    default double-buffering does not silently double the resident footprint."""
    if hasattr(pl, "Buffered"):
        try:
            return pl.BlockSpec(block_shape, index_map, pipeline_mode=pl.Buffered(1))
        except (TypeError, ValueError):
            pass
    return pl.BlockSpec(block_shape, index_map)


# ----------------------------------------------------------------------------
# Pass 1: h = x @ W1, accumulated over K slices of W1 in an f32 VMEM scratch.
# At the last K step the tile is written once as bf16 (reused by pass 2) and the
# per-row-tile partial sum-of-squares (per feature) is emitted.  The row axis is
# "parallel" -> megacore-sharded on v7x; partials are per-tile, so no race.
# ----------------------------------------------------------------------------
def _linear1_stats_kernel(x_ref, w1_ref, h_ref, ssq_ref, acc_ref):
    k = pl.program_id(1)

    @pl.when(k == 0)
    def _init():
        acc_ref[...] = jnp.zeros_like(acc_ref)

    acc_ref[...] += jnp.dot(x_ref[...], w1_ref[...],
                            preferred_element_type=jnp.float32)

    @pl.when(k == pl.num_programs(1) - 1)
    def _finalize():
        h = acc_ref[...]
        h_ref[...] = h.astype(jnp.bfloat16)
        ssq_ref[...] = jnp.sum(h * h, axis=0, keepdims=True)[None]


# ----------------------------------------------------------------------------
# Pass 2: fused (Linear1-bias + BatchNorm) affine + softmax + Linear2, consuming
# the pass-1-materialized bf16 h.  Padded feature lanes carry scale=0 / shift=-1e30
# so they vanish from the softmax; padded rows are sliced off outside the kernel.
# ----------------------------------------------------------------------------
def _bn_softmax_linear2_kernel(h_ref, scale_ref, shift_ref, w2_ref, b2_ref, o_ref):
    h = h_ref[...].astype(jnp.float32) * scale_ref[...] + shift_ref[...]
    m = jnp.max(h, axis=1, keepdims=True)
    e = jnp.exp(h - m)
    inv = pl.reciprocal(jnp.sum(e, axis=1, keepdims=True), approx=True)   # EUP slot
    s = (e * inv).astype(jnp.bfloat16)                                    # bf16 MXU feed
    o_ref[...] = (jnp.dot(s, w2_ref[...], preferred_element_type=jnp.float32)
                  + b2_ref[...])


def _encoder_forward(x_pad, w1_p, mean_x_p, gamma_p, beta_p, w2_p, b2_p,
                     *, n_real, h_real, d_real, tile_n, tk, vmem_limit):
    n_pad, t_pad = x_pad.shape
    h_pad = w1_p.shape[1]
    d_pad = w2_p.shape[1]
    n_tiles = n_pad // tile_n
    n_k = t_pad // tk

    # --------- pass 1: h = x @ W1 (materialized once) + per-tile sumsq ----------
    w1_spec = (_resident_spec((tk, h_pad), lambda i, k: (k, 0)) if n_k == 1
               else pl.BlockSpec((tk, h_pad), lambda i, k: (k, 0)))
    pass1_cost = pl.CostEstimate(
        flops=int(2 * n_pad * t_pad * h_pad + 3 * n_pad * h_pad),
        transcendentals=0,
        bytes_accessed=int(2 * n_pad * t_pad
                           + 2 * t_pad * h_pad * (1 if n_k == 1 else n_tiles)
                           + 2 * n_pad * h_pad + 4 * n_tiles * h_pad))
    h_bf16, ssq_part = pl.pallas_call(
        _linear1_stats_kernel,
        out_shape=(jax.ShapeDtypeStruct((n_pad, h_pad), jnp.bfloat16),
                   jax.ShapeDtypeStruct((n_tiles, 1, h_pad), jnp.float32)),
        grid=(n_tiles, n_k),
        in_specs=[pl.BlockSpec((tile_n, tk), lambda i, k: (i, k)),
                  w1_spec],
        out_specs=(pl.BlockSpec((tile_n, h_pad), lambda i, k: (i, 0)),
                   pl.BlockSpec((1, 1, h_pad), lambda i, k: (i, 0, 0))),
        scratch_shapes=[pltpu.VMEM((tile_n, h_pad), jnp.float32)],
        compiler_params=pltpu.CompilerParams(
            dimension_semantics=("parallel", "arbitrary"),  # rows shard across TCs
            vmem_limit_bytes=vmem_limit),
        cost_estimate=pass1_cost,
    )(x_pad, w1_p)

    # ---- wrapper: batch variance -> fused (Linear1 bias + BatchNorm) affine ----
    # Padded x rows are exactly zero -> zero sumsq contribution, so divide by the
    # real row count.  mean(x@W1) was precomputed at init (input_r is static); the
    # E[h^2] - E[h]^2 form is clamped against tiny negative round-off.  The Linear1
    # bias cancels exactly under training-mode BatchNorm and never appears here.
    sumsq = jnp.sum(ssq_part[:, 0, :], axis=0, keepdims=True)        # (1, h_pad)
    var = jnp.maximum(sumsq / n_real - mean_x_p * mean_x_p, 0.0)
    scale = jax.lax.rsqrt(var + 1e-5) * gamma_p
    shift = beta_p - mean_x_p * scale

    lane = jnp.arange(h_pad, dtype=jnp.int32)[None, :]
    scale = jnp.where(lane < h_real, scale, 0.0)
    shift = jnp.where(lane < h_real, shift, -1e30)   # padded lanes drop from softmax

    # ------------- pass 2: BN affine + softmax + Linear2 (row-tiled) ------------
    pass2_cost = pl.CostEstimate(
        flops=int(2 * n_pad * h_pad * d_pad + 6 * n_pad * h_pad),
        transcendentals=int(n_pad * h_pad + n_pad),
        bytes_accessed=int(2 * n_pad * h_pad + 2 * h_pad * d_pad
                           + 4 * n_pad * d_pad + 4 * (2 * h_pad + d_pad)))
    out = pl.pallas_call(
        _bn_softmax_linear2_kernel,
        out_shape=jax.ShapeDtypeStruct((n_pad, d_pad), jnp.float32),
        grid=(n_tiles,),
        in_specs=[pl.BlockSpec((tile_n, h_pad), lambda i: (i, 0)),
                  _resident_spec((1, h_pad), lambda i: (0, 0)),
                  _resident_spec((1, h_pad), lambda i: (0, 0)),
                  _resident_spec((h_pad, d_pad), lambda i: (0, 0)),   # resident W2
                  _resident_spec((1, d_pad), lambda i: (0, 0))],
        out_specs=pl.BlockSpec((tile_n, d_pad), lambda i: (i, 0)),    # lane-dense store
        compiler_params=pltpu.CompilerParams(
            dimension_semantics=("parallel",),          # shards across v7x's 2 TCs
            vmem_limit_bytes=vmem_limit),
        cost_estimate=pass2_cost,
    )(h_bf16, scale, shift, w2_p, b2_p)

    return out[:n_real, :d_real]


# ----------------------------------------------------------------------------
# EncoderLayer equivalent (id = 0 and id = 1 supported)
# ----------------------------------------------------------------------------
class EncoderLayerPallas:
    def __init__(self, dimension, DKG, id, key):
        DKG = np.asarray(DKG, dtype=np.int64)
        self.DKG = DKG
        self.id = id
        self.drugNumber = len(np.unique(DKG[:, 0]))
        self.tailNumber = len(np.unique(DKG[:, 1]))
        hidden = self.tailNumber // 2
        self.hidden = hidden
        self.dimension = dimension

        # build input_r exactly like the torch __init__
        input_r = np.zeros((self.drugNumber, self.tailNumber), dtype=np.float32)
        if id == 0:
            for m in DKG:
                input_r[m[0], m[1]] = 1.0
        elif id == 1:
            for m in DKG:
                if m[-1] == 1:
                    input_r[m[0], m[1]] = 1.0
                    input_r[m[1], m[0]] = 1.0
        self.input_r = jnp.asarray(input_r)

        # deterministic parameter init (xavier_uniform_ weights, zero biases,
        # BatchNorm gamma=1 / beta=0)
        k1, k2 = jax.random.split(key)

        def xavier(k, out_f, in_f):
            bound = float(np.sqrt(6.0 / (in_f + out_f)))
            return jax.random.uniform(k, (out_f, in_f), jnp.float32, -bound, bound)

        w1 = xavier(k1, hidden, self.tailNumber)      # torch layout (H, T)
        w2 = xavier(k2, dimension, hidden)            # torch layout (D, H)
        b1 = jnp.zeros((1, hidden), jnp.float32)
        b2 = jnp.zeros((1, dimension), jnp.float32)
        gamma = jnp.ones((1, hidden), jnp.float32)
        beta = jnp.zeros((1, hidden), jnp.float32)

        # ---- MXU-friendly feature padding + unified VMEM-budget-driven tiling ----
        lane = _lane_multiple()                       # 256 on v6e/v7x, 128 on v5e
        t_pad = _round_up(self.tailNumber, lane)
        h_pad = _round_up(max(hidden, 1), lane)
        d_pad = _round_up(dimension, 128)
        budget = _vmem_budget_bytes()
        tk = _pick_k_tile(t_pad, h_pad, budget, lane)
        w1_bufs = 1 if tk == t_pad else 2             # single-buffered only if resident
        resident = (w1_bufs * 2 * tk * h_pad          # W1 (slice), bf16
                    + 2 * h_pad * d_pad               # W2, bf16, single-buffered
                    + 4 * (3 * h_pad + 2 * d_pad))    # f32 per-feature vectors
        tile_n = _pick_tile_rows(self.drugNumber, tk, h_pad, d_pad, budget, resident)
        n_pad = _round_up(self.drugNumber, tile_n)
        self._tile_n, self._tk = tile_n, tk

        def pad2(a, rows, cols):
            out = jnp.zeros((rows, cols), a.dtype)
            return out.at[:a.shape[0], :a.shape[1]].set(a)

        self._x_p = pad2(self.input_r, n_pad, t_pad).astype(jnp.bfloat16)  # 0/1: exact
        self._w1_p = pad2(jnp.transpose(w1), t_pad, h_pad).astype(jnp.bfloat16)
        self._w2_p = pad2(jnp.transpose(w2), h_pad, d_pad).astype(jnp.bfloat16)
        self._b2_p = pad2(b2, 1, d_pad)
        self._gamma_p = pad2(gamma, 1, h_pad)
        self._beta_p = pad2(beta, 1, h_pad)

        # f32 views of the exact (bf16-rounded) parameters the kernels use,
        # exposed for reference checks.
        self.w1_t = self._w1_p[:self.tailNumber, :hidden].astype(jnp.float32)
        self.w2_t = self._w2_p[:hidden, :dimension].astype(jnp.float32)
        self.b1, self.b2, self.gamma, self.beta = b1, b2, gamma, beta

        # mean(x @ W1) over the batch is static (input_r and W1 are fixed):
        # colsum(x) @ W1 / N computed once in f32.  Padded W1 columns are zero,
        # so padded lanes get mean 0.
        colsum = jnp.sum(self._x_p.astype(jnp.float32), axis=0, keepdims=True)
        self._mean_x_p = (colsum @ self._w1_p.astype(jnp.float32)) / float(self.drugNumber)

        self._forward = jax.jit(functools.partial(
            _encoder_forward, n_real=self.drugNumber, h_real=hidden,
            d_real=dimension, tile_n=tile_n, tk=tk, vmem_limit=budget))

    def __call__(self, arguments):
        if self.id == 0:
            embedding1, embedding2, X = arguments
        else:
            embedding1, embedding2, embedding3, X = arguments

        encode = self._forward(self._x_p, self._w1_p, self._mean_x_p,
                               self._gamma_p, self._beta_p,
                               self._w2_p, self._b2_p)

        if self.id == 0:
            return (embedding1, embedding2, encode, X)
        return (embedding1, embedding2, embedding3, encode, X)


# ----------------------------------------------------------------------------
# Pure-JAX reference (training-mode BatchNorm, biased batch variance)
# ----------------------------------------------------------------------------
def encoder_ref(x, w1_t, b1, gamma, beta, w2_t, b2):
    h = x @ w1_t + b1
    mean = jnp.mean(h, axis=0, keepdims=True)
    var = jnp.mean((h - mean) ** 2, axis=0, keepdims=True)
    h = (h - mean) * jax.lax.rsqrt(var + 1e-5) * gamma + beta
    h = jax.nn.softmax(h, axis=1)
    return h @ w2_t + b2


if __name__ == "__main__":
    # Small synthetic knowledge graph: 8 drugs, 16 tail entities.
    edges = [(d, t, 1 if (d + t) % 2 == 0 else 0)
             for d in range(8) for t in range(16) if (d + t) % 3 == 0]
    DKG = np.array(edges, dtype=np.int64)

    dimension = 32
    key = jax.random.PRNGKey(0)
    k_param, k_e1, k_e2, k_x = jax.random.split(key, 4)

    layer = EncoderLayerPallas(dimension, DKG, id=0, key=k_param)

    embedding1 = jax.random.normal(k_e1, (8, dimension), jnp.float32)
    embedding2 = jax.random.normal(k_e2, (8, dimension), jnp.float32)
    X = jax.random.normal(k_x, (2, 4, 16, 16), jnp.float32)  # passed through

    e1, e2, encode, x_out = layer((embedding1, embedding2, X))
    encode = jax.block_until_ready(encode)

    ref = encoder_ref(layer.input_r, layer.w1_t, layer.b1, layer.gamma,
                      layer.beta, layer.w2_t, layer.b2)
    # bf16 matmul inputs, bf16-materialized h, and EUP approx reciprocal in the
    # softmax -> loose tolerance
    np.testing.assert_allclose(np.asarray(encode), np.asarray(ref),
                               rtol=2e-2, atol=2e-2)
    assert encode.shape == (layer.drugNumber, dimension)
    assert x_out.shape == X.shape

    print("KERNEL_OK")
</pallas_src>

<mosaic_0001>
module attributes {stable_mosaic.version = 11 : i64} {
  func.func @_linear1_stats_kernel(%arg0: i32, %arg1: i32, %arg2: memref<16x256xbf16, #tpu.memory_space<vmem>>, %arg3: memref<256x256xbf16, #tpu.memory_space<vmem>>, %arg4: memref<16x256xbf16, #tpu.memory_space<vmem>>, %arg5: memref<1x1x256xf32, #tpu.memory_space<vmem>>, %arg6: memref<16x256xf32, #tpu.memory_space<vmem>>) attributes {dimension_semantics = [#tpu.dimension_semantics<parallel>, #tpu.dimension_semantics<arbitrary>], iteration_bounds = array<i64: 1, 1>, scalar_prefetch = 0 : i64, scratch_operands = 1 : i64, tpu.core_type = #tpu.core_type<tc>, window_params = [{transform_indices = @transform_0, window_bounds = array<i64: 16, 256>}, {pipeline_mode = #tpu.pipeline_mode<synchronous>, transform_indices = @transform_1, window_bounds = array<i64: 256, 256>}, {transform_indices = @transform_2, window_bounds = array<i64: 16, 256>}, {transform_indices = @transform_3, window_bounds = array<i64: 1, 1, 256>}]} {
    %c0_i32 = arith.constant 0 : i32
    %0 = arith.cmpi eq, %arg1, %c0_i32 : i32
    %1 = arith.extui %0 : i1 to i32
    %c0_i32_0 = arith.constant 0 : i32
    %2 = arith.cmpi ne, %1, %c0_i32_0 : i32
    scf.if %2 {
      %cst_10 = arith.constant 0.000000e+00 : f32
      %12 = vector.broadcast %cst_10 : f32 to vector<16x256xf32>
      %c0_11 = arith.constant 0 : index
      %c0_12 = arith.constant 0 : index
      %13 = vector.load %arg6[%c0_11, %c0_12] : memref<16x256xf32, #tpu.memory_space<vmem>>, vector<16x256xf32>
      tpu.vector_store %arg6[%c0_11, %c0_12], %12 {strides = array<i32>} : memref<16x256xf32, #tpu.memory_space<vmem>>, vector<16x256xf32>,
    } else {
    }
    %c0 = arith.constant 0 : index
    %c0_1 = arith.constant 0 : index
    %3 = vector.load %arg6[%c0, %c0_1] : memref<16x256xf32, #tpu.memory_space<vmem>>, vector<16x256xf32>
    %c0_2 = arith.constant 0 : index
    %c0_3 = arith.constant 0 : index
    %4 = vector.load %arg2[%c0_2, %c0_3] : memref<16x256xbf16, #tpu.memory_space<vmem>>, vector<16x256xbf16>
    %c0_4 = arith.constant 0 : index
    %c0_5 = arith.constant 0 : index
    %5 = vector.load %arg3[%c0_4, %c0_5] : memref<256x256xbf16, #tpu.memory_space<vmem>>, vector<256x256xbf16>
    %cst = arith.constant dense<0.000000e+00> : vector<16x256xf32>
    %6 = tpu.matmul %4, %5, %cst {dimension_numbers = #tpu.dot_dimension_numbers<[1], [0], [0], [1], [0, 0, 1, 1], [], []>} : vector<16x256xbf16>, vector<256x256xbf16>, vector<16x256xf32> -> vector<16x256xf32>
    %7 = arith.addf %3, %6 : vector<16x256xf32>
    %c0_6 = arith.constant 0 : index
    %c0_7 = arith.constant 0 : index
    %8 = vector.load %arg6[%c0_6, %c0_7] : memref<16x256xf32, #tpu.memory_space<vmem>>, vector<16x256xf32>
    tpu.vector_store %arg6[%c0_6, %c0_7], %7 {strides = array<i32>} : memref<16x256xf32, #tpu.memory_space<vmem>>, vector<16x256xf32>,
    %c0_i32_8 = arith.constant 0 : i32
    %9 = arith.cmpi eq, %arg1, %c0_i32_8 : i32
    %10 = arith.extui %9 : i1 to i32
    %c0_i32_9 = arith.constant 0 : i32
    %11 = arith.cmpi ne, %10, %c0_i32_9 : i32
    scf.if %11 {
      %c0_10 = arith.constant 0 : index
      %c0_11 = arith.constant 0 : index
      %12 = vector.load %arg6[%c0_10, %c0_11] : memref<16x256xf32, #tpu.memory_space<vmem>>, vector<16x256xf32>
      %13 = arith.truncf %12 : vector<16x256xf32> to vector<16x256xbf16>
      %c0_12 = arith.constant 0 : index
      %c0_13 = arith.constant 0 : index
      %14 = vector.load %arg4[%c0_12, %c0_13] : memref<16x256xbf16, #tpu.memory_space<vmem>>, vector<16x256xbf16>
      tpu.vector_store %arg4[%c0_12, %c0_13], %13 {strides = array<i32>} : memref<16x256xbf16, #tpu.memory_space<vmem>>, vector<16x256xbf16>,
      %15 = arith.mulf %12, %12 : vector<16x256xf32>
      %cst_14 = arith.constant dense<0.000000e+00> : vector<256xf32>
      %16 = vector.multi_reduction <add>, %15, %cst_14 [0] : vector<16x256xf32> to vector<256xf32>
      %17 = vector.shape_cast %16 : vector<256xf32> to vector<1x256xf32>
      %18 = vector.shape_cast %17 : vector<1x256xf32> to vector<1x1x256xf32>
      %c0_15 = arith.constant 0 : index
      %c0_16 = arith.constant 0 : index
      %c0_17 = arith.constant 0 : index
      %19 = vector.load %arg5[%c0_15, %c0_16, %c0_17] : memref<1x1x256xf32, #tpu.memory_space<vmem>>, vector<1x1x256xf32>
      tpu.vector_store %arg5[%c0_15, %c0_16, %c0_17], %18 {strides = array<i32>} : memref<1x1x256xf32, #tpu.memory_space<vmem>>, vector<1x1x256xf32>,
    } else {
    }
    return
  }
  func.func @transform_0(%arg0: i32, %arg1: i32) -> (i32, i32) {
    %c0_i32 = arith.constant 0 : i32
    return %arg0, %arg1 : i32, i32
  }
  func.func @transform_1(%arg0: i32, %arg1: i32) -> (i32, i32) {
    %c0_i32 = arith.constant 0 : i32
    %c0_i32_0 = arith.constant 0 : i32
    return %arg1, %c0_i32 : i32, i32
  }
  func.func @transform_2(%arg0: i32, %arg1: i32) -> (i32, i32) {
    %c0_i32 = arith.constant 0 : i32
    %c0_i32_0 = arith.constant 0 : i32
    return %arg0, %c0_i32 : i32, i32
  }
  func.func @transform_3(%arg0: i32, %arg1: i32) -> (i32, i32, i32) {
    %c0_i32 = arith.constant 0 : i32
    %c0_i32_0 = arith.constant 0 : i32
    %c0_i32_1 = arith.constant 0 : i32
    return %arg0, %c0_i32, %c0_i32_0 : i32, i32, i32
  }
}

module attributes {stable_mosaic.version = 11 : i64} {
  func.func @_bn_softmax_linear2_kernel(%arg0: i32, %arg1: memref<16x256xbf16, #tpu.memory_space<vmem>>, %arg2: memref<1x256xf32, #tpu.memory_space<vmem>>, %arg3: memref<1x256xf32, #tpu.memory_space<vmem>>, %arg4: memref<256x128xbf16, #tpu.memory_space<vmem>>, %arg5: memref<1x128xf32, #tpu.memory_space<vmem>>, %arg6: memref<16x128xf32, #tpu.memory_space<vmem>>) attributes {dimension_semantics = [#tpu.dimension_semantics<parallel>], iteration_bounds = array<i64: 1>, scalar_prefetch = 0 : i64, scratch_operands = 0 : i64, tpu.core_type = #tpu.core_type<tc>, window_params = [{transform_indices = @transform_0, window_bounds = array<i64: 16, 256>}, {pipeline_mode = #tpu.pipeline_mode<synchronous>, transform_indices = @transform_1, window_bounds = array<i64: 1, 256>}, {pipeline_mode = #tpu.pipeline_mode<synchronous>, transform_indices = @transform_2, window_bounds = array<i64: 1, 256>}, {pipeline_mode = #tpu.pipeline_mode<synchronous>, transform_indices = @transform_3, window_bounds = array<i64: 256, 128>}, {pipeline_mode = #tpu.pipeline_mode<synchronous>, transform_indices = @transform_4, window_bounds = array<i64: 1, 128>}, {transform_indices = @transform_5, window_bounds = array<i64: 16, 128>}]} {
    %c0 = arith.constant 0 : index
    %c0_0 = arith.constant 0 : index
    %0 = vector.load %arg1[%c0, %c0_0] : memref<16x256xbf16, #tpu.memory_space<vmem>>, vector<16x256xbf16>
    %1 = arith.extf %0 : vector<16x256xbf16> to vector<16x256xf32>
    %c0_1 = arith.constant 0 : index
    %c0_2 = arith.constant 0 : index
    %2 = vector.load %arg2[%c0_1, %c0_2] : memref<1x256xf32, #tpu.memory_space<vmem>>, vector<1x256xf32>
    %3 = vector.broadcast %2 : vector<1x256xf32> to vector<16x256xf32>
    %4 = arith.mulf %1, %3 : vector<16x256xf32>
    %c0_3 = arith.constant 0 : index
    %c0_4 = arith.constant 0 : index
    %5 = vector.load %arg3[%c0_3, %c0_4] : memref<1x256xf32, #tpu.memory_space<vmem>>, vector<1x256xf32>
    %6 = vector.broadcast %5 : vector<1x256xf32> to vector<16x256xf32>
    %7 = arith.addf %4, %6 : vector<16x256xf32>
    %cst = arith.constant dense<0xFF800000> : vector<16xf32>
    %8 = vector.multi_reduction <maximumf>, %7, %cst [1] : vector<16x256xf32> to vector<16xf32>
    %9 = vector.shape_cast %8 : vector<16xf32> to vector<16x1xf32>
    %10 = vector.broadcast %9 : vector<16x1xf32> to vector<16x256xf32>
    %11 = arith.subf %7, %10 : vector<16x256xf32>
    %12 = math.exp %11 : vector<16x256xf32>
    %cst_5 = arith.constant dense<0.000000e+00> : vector<16xf32>
    %13 = vector.multi_reduction <add>, %12, %cst_5 [1] : vector<16x256xf32> to vector<16xf32>
    %14 = vector.shape_cast %13 : vector<16xf32> to vector<16x1xf32>
    %15 = tpu.reciprocal %14 {approx = true} : vector<16x1xf32> -> vector<16x1xf32>
    %16 = vector.broadcast %15 : vector<16x1xf32> to vector<16x256xf32>
    %17 = arith.mulf %12, %16 : vector<16x256xf32>
    %18 = arith.truncf %17 : vector<16x256xf32> to vector<16x256xbf16>
    %c0_6 = arith.constant 0 : index
    %c0_7 = arith.constant 0 : index
    %19 = vector.load %arg4[%c0_6, %c0_7] : memref<256x128xbf16, #tpu.memory_space<vmem>>, vector<256x128xbf16>
    %cst_8 = arith.constant dense<0.000000e+00> : vector<16x128xf32>
    %20 = tpu.matmul %18, %19, %cst_8 {dimension_numbers = #tpu.dot_dimension_numbers<[1], [0], [0], [1], [0, 0, 1, 1], [], []>} : vector<16x256xbf16>, vector<256x128xbf16>, vector<16x128xf32> -> vector<16x128xf32>
    %c0_9 = arith.constant 0 : index
    %c0_10 = arith.constant 0 : index
    %21 = vector.load %arg5[%c0_9, %c0_10] : memref<1x128xf32, #tpu.memory_space<vmem>>, vector<1x128xf32>
    %22 = vector.broadcast %21 : vector<1x128xf32> to vector<16x128xf32>
    %23 = arith.addf %20, %22 : vector<16x128xf32>
    %c0_11 = arith.constant 0 : index
    %c0_12 = arith.constant 0 : index
    %24 = vector.load %arg6[%c0_11, %c0_12] : memref<16x128xf32, #tpu.memory_space<vmem>>, vector<16x128xf32>
    tpu.vector_store %arg6[%c0_11, %c0_12], %23 {strides = array<i32>} : memref<16x128xf32, #tpu.memory_space<vmem>>, vector<16x128xf32>,
    return
  }
  func.func @transform_0(%arg0: i32) -> (i32, i32) {
    %c0_i32 = arith.constant 0 : i32
    %c0_i32_0 = arith.constant 0 : i32
    return %arg0, %c0_i32 : i32, i32
  }
  func.func @transform_1(%arg0: i32) -> (i32, i32) {
    %c0_i32 = arith.constant 0 : i32
    %c0_i32_0 = arith.constant 0 : i32
    %c0_i32_1 = arith.constant 0 : i32
    return %c0_i32, %c0_i32_0 : i32, i32
  }
  func.func @transform_2(%arg0: i32) -> (i32, i32) {
    %c0_i32 = arith.constant 0 : i32
    %c0_i32_0 = arith.constant 0 : i32
    %c0_i32_1 = arith.constant 0 : i32
    return %c0_i32, %c0_i32_0 : i32, i32
  }
  func.func @transform_3(%arg0: i32) -> (i32, i32) {
    %c0_i32 = arith.constant 0 : i32
    %c0_i32_0 = arith.constant 0 : i32
    %c0_i32_1 = arith.constant 0 : i32
    return %c0_i32, %c0_i32_0 : i32, i32
  }
  func.func @transform_4(%arg0: i32) -> (i32, i32) {
    %c0_i32 = arith.constant 0 : i32
    %c0_i32_0 = arith.constant 0 : i32
    %c0_i32_1 = arith.constant 0 : i32
    return %c0_i32, %c0_i32_0 : i32, i32
  }
  func.func @transform_5(%arg0: i32) -> (i32, i32) {
    %c0_i32 = arith.constant 0 : i32
    %c0_i32_0 = arith.constant 0 : i32
    return %arg0, %c0_i32 : i32, i32
  }
}

</mosaic_0001>

<llo_original>
// kernel: _encoder_forward.3
$region0: #{_encoder_forward.3}
  #allocation0 [shape = 'u32[]', space=smem, size = 0x4, offset = 0x4, fixed_abs, tag = 'smem constant byte address 0x4 - core index']
  #allocation1 [shape = 'u32[144,128]{1,0:T(1,128)}', space=vmem, size = 0x12000, scoped, tag = 'internal scratch']
  %s0 = inlined_call_operand.vmem [shape: bf16[16,256], index: 0, kind: input, shape index: {}]
  %s1 = inlined_call_operand.vmem [shape: f32[1,256], index: 1, kind: input, shape index: {}]
  %s2 = inlined_call_operand.vmem [shape: f32[1,256], index: 2, kind: input, shape index: {}]
  %s3 = inlined_call_operand.vmem [shape: bf16[256,128], index: 3, kind: input, shape index: {}]
  %s4 = inlined_call_operand.vmem [shape: f32[1,128], index: 4, kind: input, shape index: {}]
  %s5 = inlined_call_operand.vmem [shape: f32[16,128], index: 5, kind: output, shape index: {}]
  %s6 = sld [smem:[#allocation0]]
  $region30: #{_encoder_forward.3} parent=0
    _
  %s8 = ssub.s32 1, %s6
  %s9 = scalar_select 0, %s8, %s6
  // Predicated region
  $region2: #{_encoder_forward.3} parent=0 // pred_check
    _
  $region3: #{_encoder_forward.3} parent=0 // pred_check_branch
    %11 = sbr.rel (0) target = $region5
  $region4: #{_encoder_forward.3} parent=0 // pred_region
    _
  $region5: #{_encoder_forward.3} parent=0 // pred_fallthru
    _
  // Predicated region
  $region6: #{_encoder_forward.3} parent=0 // pred_check
    _
  $region7: #{_encoder_forward.3} parent=0 // pred_check_branch
    %13 = sbr.rel (0) target = $region9
  $region8: #{_encoder_forward.3} parent=0 // pred_region
    _
  $region9: #{_encoder_forward.3} parent=0 // pred_fallthru
    _
  // Predicated region
  $region10: #{_encoder_forward.3} parent=0 // pred_check
    _
  $region11: #{_encoder_forward.3} parent=0 // pred_check_branch
    %15 = sbr.rel (0) target = $region13
  $region12: #{_encoder_forward.3} parent=0 // pred_region
    _
  $region13: #{_encoder_forward.3} parent=0 // pred_fallthru
    _
  // Predicated region
  $region14: #{_encoder_forward.3} parent=0 // pred_check
    _
  $region15: #{_encoder_forward.3} parent=0 // pred_check_branch
    %17 = sbr.rel (0) target = $region17
  $region16: #{_encoder_forward.3} parent=0 // pred_region
    _
  $region17: #{_encoder_forward.3} parent=0 // pred_fallthru
    _
  // Predicated region
  $region18: #{_encoder_forward.3} parent=0 // pred_check
    _
  $region19: #{_encoder_forward.3} parent=0 // pred_check_branch
    %19 = sbr.rel (0) target = $region21
  $region20: #{_encoder_forward.3} parent=0 // pred_region
    _
  $region21: #{_encoder_forward.3} parent=0 // pred_fallthru
    _
  %v21 = vld [vmem:[%s0] sm:$0xff]
  %v22 = vld [vmem:[%s0 + $0x8] sm:$0xff]
  %v23 = vunpack.c.l.bf16 %v21
  %v24 = vunpack.c.h.bf16 %v21
  %v25 = vunpack.c.l.bf16 %v22
  %v26 = vunpack.c.h.bf16 %v22
  %v27 = vld [vmem:[%s1] sm:$0x3]
  %v29 = vlaneseq
  %v30 = vshrl.u32 %v29, 7
  %v31 = vsub.s32 0, %v30
  %v32 = vrot.slane %v27, %v31
  %v33 = vlaneseq
  %v34 = vshrl.u32 %v33, 7
  %v35 = vsub.s32 1, %v34
  %v36 = vrot.slane %v27, %v35
  %v39 = vmul.f32 %v23, %v32
  %v40 = vmul.f32 %v24, %v36
  %v41 = vmul.f32 %v25, %v32
  %v42 = vmul.f32 %v26, %v36
  %v43 = vld [vmem:[%s2] sm:$0x3]
  %v45 = vlaneseq
  %v46 = vshrl.u32 %v45, 7
  %v47 = vsub.s32 0, %v46
  %v48 = vrot.slane %v43, %v47
  %v49 = vlaneseq
  %v50 = vshrl.u32 %v49, 7
  %v51 = vsub.s32 1, %v50
  %v52 = vrot.slane %v43, %v51
  %v55 = vadd.f32 %v39, %v48
  %v56 = vadd.f32 %v40, %v52
  %v57 = vadd.f32 %v41, %v48
  %v58 = vadd.f32 %v42, %v52
  %v59 = vmax.f32 %v55, %v56
  %60 = vmax.xlane.f32.xlu0 %v59
  %v61 = vpop.xlane.xlu0 %60
  %v62 = vmax.f32 %v57, %v58
  %63 = vmax.xlane.f32.xlu0 %v62
  %v64 = vpop.xlane.xlu0 %63
  %v65 = vsub.f32 %v55, %v61
  %v66 = vsub.f32 %v56, %v61
  %v67 = vsub.f32 %v57, %v64
  %v68 = vsub.f32 %v58, %v64
  %v69 = vmul.f32 %v65, 1.442695
  %v70 = vpow.pop %v69
  %v71 = vmul.f32 %v66, 1.442695
  %v72 = vpow.pop %v71
  %v73 = vmul.f32 %v67, 1.442695
  %v74 = vpow.pop %v73
  %v75 = vmul.f32 %v68, 1.442695
  %v76 = vpow.pop %v75
  %v77 = vadd.f32 %v70, %v72
  %78 = vadd.xlane.f32.xlu0 %v77
  %v79 = vpop.xlane.xlu0 %78
  %v80 = vadd.f32 %v74, %v76
  %81 = vadd.xlane.f32.xlu0 %v80
  %v82 = vpop.xlane.xlu0 %81
  %v83 = vrcp.pop %v79
  %v84 = vrcp.pop %v82
  %v85 = vmul.f32 %v70, %v83
  %v86 = vmul.f32 %v72, %v83
  %v87 = vmul.f32 %v74, %v84
  %v88 = vmul.f32 %v76, %v84
  %v89 = vpack.c.bf16 %v87, %v85
  %v90 = vpack.c.bf16 %v88, %v86
  %v91 = vld [vmem:[%s3] sm:$0xf]
  %v92 = vld [vmem:[%s3 + $0x4] sm:$0xf]
  %v93 = vld [vmem:[%s3 + $0x8] sm:$0xf]
  %v94 = vld [vmem:[%s3 + $0xc] sm:$0xf]
  %v95 = vld [vmem:[%s3 + $0x10] sm:$0xf]
  %v96 = vld [vmem:[%s3 + $0x14] sm:$0xf]
  %v97 = vld [vmem:[%s3 + $0x18] sm:$0xf]
  %v98 = vld [vmem:[%s3 + $0x1c] sm:$0xf]
  %v99 = vld [vmem:[%s3 + $0x20] sm:$0xf]
  %v100 = vld [vmem:[%s3 + $0x24] sm:$0xf]
  %v101 = vld [vmem:[%s3 + $0x28] sm:$0xf]
  %v102 = vld [vmem:[%s3 + $0x2c] sm:$0xf]
  %v103 = vld [vmem:[%s3 + $0x30] sm:$0xf]
  %v104 = vld [vmem:[%s3 + $0x34] sm:$0xf]
  %v105 = vld [vmem:[%s3 + $0x38] sm:$0xf]
  %v106 = vld [vmem:[%s3 + $0x3c] sm:$0xf]
  %v107 = vld [vmem:[%s3 + $0x40] sm:$0xf]
  %v108 = vld [vmem:[%s3 + $0x44] sm:$0xf]
  %v109 = vld [vmem:[%s3 + $0x48] sm:$0xf]
  %v110 = vld [vmem:[%s3 + $0x4c] sm:$0xf]
  %v111 = vld [vmem:[%s3 + $0x50] sm:$0xf]
  %v112 = vld [vmem:[%s3 + $0x54] sm:$0xf]
  %v113 = vld [vmem:[%s3 + $0x58] sm:$0xf]
  %v114 = vld [vmem:[%s3 + $0x5c] sm:$0xf]
  %v115 = vld [vmem:[%s3 + $0x60] sm:$0xf]
  %v116 = vld [vmem:[%s3 + $0x64] sm:$0xf]
  %v117 = vld [vmem:[%s3 + $0x68] sm:$0xf]
  %v118 = vld [vmem:[%s3 + $0x6c] sm:$0xf]
  %v119 = vld [vmem:[%s3 + $0x70] sm:$0xf]
  %v120 = vld [vmem:[%s3 + $0x74] sm:$0xf]
  %v121 = vld [vmem:[%s3 + $0x78] sm:$0xf]
  %v122 = vld [vmem:[%s3 + $0x7c] sm:$0xf]
  %v123 = vld [vmem:[%s4] sm:$0x1]
  %v125 = vlaneseq
  %v126 = vshrl.u32 %v125, 7
  %v127 = vsub.s32 0, %v126
  %v128 = vrot.slane %v123, %v127
  %v162 = vunpack.c.l.b16 %v91
  %v163 = vunpack.c.l.b16 %v92
  %v164 = vunpack.c.l.b16 %v93
  %v165 = vunpack.c.l.b16 %v94
  %v166 = vunpack.c.l.b16 %v95
  %v167 = vunpack.c.l.b16 %v96
  %v168 = vunpack.c.l.b16 %v97
  %v169 = vunpack.c.l.b16 %v98
  %v170 = vunpack.c.l.b16 %v99
  %v171 = vunpack.c.l.b16 %v100
  %v172 = vunpack.c.l.b16 %v101
  %v173 = vunpack.c.l.b16 %v102
  %v174 = vunpack.c.l.b16 %v103
  %v175 = vunpack.c.l.b16 %v104
  %v176 = vunpack.c.l.b16 %v105
  %v177 = vunpack.c.l.b16 %v106
  %v178 = vunpack.c.l.b16 %v107
  %v179 = vunpack.c.l.b16 %v108
  %v180 = vunpack.c.l.b16 %v109
  %v181 = vunpack.c.l.b16 %v110
  %v182 = vunpack.c.l.b16 %v111
  %v183 = vunpack.c.l.b16 %v112
  %v184 = vunpack.c.l.b16 %v113
  %v185 = vunpack.c.l.b16 %v114
  %v186 = vunpack.c.l.b16 %v115
  %v187 = vunpack.c.l.b16 %v116
  %v188 = vunpack.c.l.b16 %v117
  %v189 = vunpack.c.l.b16 %v118
  %v190 = vunpack.c.l.b16 %v119
  %v191 = vunpack.c.l.b16 %v120
  %v192 = vunpack.c.l.b16 %v121
  %v193 = vunpack.c.l.b16 %v122
  %v194 = vpack.c.b16 %v163, %v162
  %v195 = vpack.c.b16 %v165, %v164
  %v196 = vpack.c.b16 %v167, %v166
  %v197 = vpack.c.b16 %v169, %v168
  %v198 = vpack.c.b16 %v171, %v170
  %v199 = vpack.c.b16 %v173, %v172
  %v200 = vpack.c.b16 %v175, %v174
  %v201 = vpack.c.b16 %v177, %v176
  %v202 = vpack.c.b16 %v179, %v178
  %v203 = vpack.c.b16 %v181, %v180
  %v204 = vpack.c.b16 %v183, %v182
  %v205 = vpack.c.b16 %v185, %v184
  %v206 = vpack.c.b16 %v187, %v186
  %v207 = vpack.c.b16 %v189, %v188
  %v208 = vpack.c.b16 %v191, %v190
  %v209 = vpack.c.b16 %v193, %v192
  %226 = vmatprep.subr.bf16.mxu0 0
  %227 = vmatpush1.bf16.msra.mxu0 %v201
  %228 = vmatprep.subr.bf16.mxu0 0
  %229 = vmatpush1.bf16.msra.mxu0 %v200
  %230 = vmatprep.subr.bf16.mxu0 0
  %231 = vmatpush1.bf16.msra.mxu0 %v199
  %232 = vmatprep.subr.bf16.mxu0 0
  %233 = vmatpush1.bf16.msra.mxu0 %v198
  %234 = vmatprep.subr.bf16.mxu0 0
  %235 = vmatpush1.bf16.msra.mxu0 %v197
  %236 = vmatprep.subr.bf16.mxu0 0
  %237 = vmatpush1.bf16.msra.mxu0 %v196
  %238 = vmatprep.subr.bf16.mxu0 0
  %239 = vmatpush1.bf16.msra.mxu0 %v195
  %240 = vmatprep.subr.bf16.mxu0 0
  %241 = vmatpush1.bf16.msra.mxu0 %v194
  %242 = vmatprep.subr.bf16.mxu0 0
  %243 = vmatpush2.bf16.msra.mxu0 %v209
  %244 = vmatprep.subr.bf16.mxu0 0
  %245 = vmatpush2.bf16.msra.mxu0 %v208
  %246 = vmatprep.subr.bf16.mxu0 0
  %247 = vmatpush2.bf16.msra.mxu0 %v207
  %248 = vmatprep.subr.bf16.mxu0 0
  %249 = vmatpush2.bf16.msra.mxu0 %v206
  %250 = vmatprep.subr.bf16.mxu0 0
  %251 = vmatpush2.bf16.msra.mxu0 %v205
  %252 = vmatprep.subr.bf16.mxu0 0
  %253 = vmatpush2.bf16.msra.mxu0 %v204
  %254 = vmatprep.subr.bf16.mxu0 0
  %255 = vmatpush2.bf16.msra.mxu0 %v203
  %256 = vmatprep.subr.bf16.mxu0 0
  %257 = vmatpush2.bf16.msra.mxu0 %v202
  %258 = vmatprep.mubr.bf16.mxu0 %v90
  %259 = vmatmul.mubr.bf16.gmra.mxu0 %v89
  %v260 = vpop.f32.mrf.mxu0
  %v261 = vadd.f32 %v128, %v260
  %v262 = vpop.f32.mrf.mxu0
  %v263 = vpop.f32.mrf.mxu0
  %v264 = vadd.f32 %v128, %v263
  %v265 = vpop.f32.mrf.mxu0
  %266 = vdwg.mxu0
  %267 = vst [vmem:[%s5] sm:$0xff] %v261
  %268 = vst [vmem:[%s5 + $0x8] sm:$0xff] %v264
  // Predicated region
  $region22: #{_encoder_forward.3} parent=0 // pred_check
    _
  $region23: #{_encoder_forward.3} parent=0 // pred_check_branch
    %270 = sbr.rel (0) target = $region25
  $region24: #{_encoder_forward.3} parent=0 // pred_region
    _
  $region25: #{_encoder_forward.3} parent=0 // pred_fallthru
    _
  // Predicated region
  $region26: #{_encoder_forward.3} parent=0 // pred_check
    _
  $region27: #{_encoder_forward.3} parent=0 // pred_check_branch
    %272 = sbr.rel (0) target = $region29
  $region28: #{_encoder_forward.3} parent=0 // pred_region
    _
  $region29: #{_encoder_forward.3} parent=0 // pred_fallthru
    _

// kernel: _encoder_forward.2
$region0: #{_encoder_forward.2}
  #allocation0 [shape = 'u32[]', space=smem, size = 0x4, offset = 0x4, fixed_abs, tag = 'smem constant byte address 0x4 - core index']
  #allocation1 [shape = 'u32[144,128]{1,0:T(1,128)}', space=vmem, size = 0x12000, scoped, tag = 'internal scratch']
  #allocation2 [shape = 'f32[16,256]{1,0:T(8,128)}', space=vmem, size = 0x4000, scoped, tag = 'scratch operand']
  %s0 = inlined_call_operand.hbm [shape: bf16[16,256], index: 0, kind: input, shape index: {}]
  %s1 = inlined_call_operand.hbm [shape: bf16[256,256], index: 1, kind: input, shape index: {}]
  %s2 = inlined_call_operand.vmem [shape: bf16[16,256], index: 2, kind: output, shape index: {0}]
  %s3 = inlined_call_operand.vmem [shape: f32[1,1,256], index: 3, kind: output, shape index: {1}]
  %4 = xla_tuple %s2, %s3
  %s5 = sld [smem:[#allocation0]]
  $region42: #{_encoder_forward.2} parent=0
    _
  %s7 = ssub.s32 1, %s5
  %s8 = scalar_select 0, %s7, %s5
  $region1: #{_encoder_forward.2} parent=0
    #allocation3 [shape = 'u8[8192]{0}', space=vmem, size = 0x2000, scoped, tag = 'input window, operand 0, single buffered']
    #allocation4 [shape = 's32[1]{0}', space=sflag, size = 0x4, scoped, tag = 'scoped memory for _encoder_forward.2']
    #allocation5 [shape = 'u8[131072]{0}', space=vmem, size = 0x20000, scoped, tag = 'input window, operand 1, single buffered']
    #allocation6 [shape = 's32[1]{0}', space=sflag, size = 0x4, scoped, tag = 'scoped memory for _encoder_forward.2']
    %9 = vsyncpa [#allocation4], 0
    %10 = vsyncpa [#allocation6], 0
    // Predicated region
    $region2: #{_encoder_forward.2} parent=1 // pred_check
      _
    $region3: #{_encoder_forward.2} parent=1 // pred_check_branch
      %12 = sbr.rel (0) target = $region5
    $region4: #{_encoder_forward.2} parent=1 // pred_region
      %s14 = ssub.s32 256, 256
      %15 = vsyncadd [#allocation4], %s14
      %s16 = sshll.u32 [#allocation3], 4
      %s17 = int_to_ptr.vmem [resolvable:$true] %s16
      %22 = dma.hbm_to_vmem [thread:$0]  %s0, 256, %s17, [#allocation4], 128, 128, 8
    $region5: #{_encoder_forward.2} parent=1 // pred_fallthru
      _
    // Predicated region
    $region6: #{_encoder_forward.2} parent=1 // pred_check
      _
    $region7: #{_encoder_forward.2} parent=1 // pred_check_branch
      %24 = sbr.rel (0) target = $region9
    $region8: #{_encoder_forward.2} parent=1 // pred_region
      %s26 = ssub.s32 4096, 4096
      %27 = vsyncadd [#allocation6], %s26
      %s28 = sshll.u32 [#allocation5], 4
      %s29 = int_to_ptr.vmem [resolvable:$true] %s28
      %34 = dma.hbm_to_vmem [thread:$0]  %s1, 4096, %s29, [#allocation6], 128, 128, 8
    $region9: #{_encoder_forward.2} parent=1 // pred_fallthru
      _
    // Predicated region
    $region10: #{_encoder_forward.2} parent=1 // pred_check
      _
    $region11: #{_encoder_forward.2} parent=1 // pred_check_branch
      %36 = sbr.rel (0) target = $region13
    $region12: #{_encoder_forward.2} parent=1 // pred_region
      %37 = dma.done [#allocation4], 256
    $region13: #{_encoder_forward.2} parent=1 // pred_fallthru
      _
    // Predicated region
    $region14: #{_encoder_forward.2} parent=1 // pred_check
      _
    $region15: #{_encoder_forward.2} parent=1 // pred_check_branch
      %39 = sbr.rel (0) target = $region17
    $region16: #{_encoder_forward.2} parent=1 // pred_region
      %40 = dma.done [#allocation6], 4096
    $region17: #{_encoder_forward.2} parent=1 // pred_fallthru
      _
    %p41 = scmp.eq.s32.totalorder 0, 0
    // Predicated region
    $region18: #{_encoder_forward.2} parent=1 // pred_check
      %p42 = pneg %p41
    $region19: #{_encoder_forward.2} parent=1 // pred_check_branch
      %44 = sbr.rel (%p42) target = $region21
    $region20: #{_encoder_forward.2} parent=1 // pred_region
      %45 = vst [vmem:[#allocation2] sm:$0xff] 0.0
      %46 = vst [vmem:[#allocation2 + $0x8] sm:$0xff] 0.0
      %47 = vst [vmem:[#allocation2 + $0x10] sm:$0xff] 0.0
      %48 = vst [vmem:[#allocation2 + $0x18] sm:$0xff] 0.0
    $region21: #{_encoder_forward.2} parent=1 // pred_fallthru
      _
    %v49 = vld [vmem:[#allocation2] sm:$0xff]
    %v50 = vld [vmem:[#allocation2 + $0x8] sm:$0xff]
    %v51 = vld [vmem:[#allocation2 + $0x10] sm:$0xff]
    %v52 = vld [vmem:[#allocation2 + $0x18] sm:$0xff]
    %v53 = vld [vmem:[#allocation3] sm:$0xff]
    %v54 = vld [vmem:[#allocation3 + $0x8] sm:$0xff]
    %v55 = vld [vmem:[#allocation5] sm:$0xff]
    %v56 = vld [vmem:[#allocation5 + $0x8] sm:$0xff]
    %v57 = vld [vmem:[#allocation5 + $0x10] sm:$0xff]
    %v58 = vld [vmem:[#allocation5 + $0x18] sm:$0xff]
    %v59 = vld [vmem:[#allocation5 + $0x20] sm:$0xff]
    %v60 = vld [vmem:[#allocation5 + $0x28] sm:$0xff]
    %v61 = vld [vmem:[#allocation5 + $0x30] sm:$0xff]
    %v62 = vld [vmem:[#allocation5 + $0x38] sm:$0xff]
    %v63 = vld [vmem:[#allocation5 + $0x40] sm:$0xff]
    %v64 = vld [vmem:[#allocation5 + $0x48] sm:$0xff]
    %v65 = vld [vmem:[#allocation5 + $0x50] sm:$0xff]
    %v66 = vld [vmem:[#allocation5 + $0x58] sm:$0xff]
    %v67 = vld [vmem:[#allocation5 + $0x60] sm:$0xff]
    %v68 = vld [vmem:[#allocation5 + $0x68] sm:$0xff]
    %v69 = vld [vmem:[#allocation5 + $0x70] sm:$0xff]
    %v70 = vld [vmem:[#allocation5 + $0x78] sm:$0xff]
    %v71 = vld [vmem:[#allocation5 + $0x80] sm:$0xff]
    %v72 = vld [vmem:[#allocation5 + $0x88] sm:$0xff]
    %v73 = vld [vmem:[#allocation5 + $0x90] sm:$0xff]
    %v74 = vld [vmem:[#allocation5 + $0x98] sm:$0xff]
    %v75 = vld [vmem:[#allocation5 + $0xa0] sm:$0xff]
    %v76 = vld [vmem:[#allocation5 + $0xa8] sm:$0xff]
    %v77 = vld [vmem:[#allocation5 + $0xb0] sm:$0xff]
    %v78 = vld [vmem:[#allocation5 + $0xb8] sm:$0xff]
    %v79 = vld [vmem:[#allocation5 + $0xc0] sm:$0xff]
    %v80 = vld [vmem:[#allocation5 + $0xc8] sm:$0xff]
    %v81 = vld [vmem:[#allocation5 + $0xd0] sm:$0xff]
    %v82 = vld [vmem:[#allocation5 + $0xd8] sm:$0xff]
    %v83 = vld [vmem:[#allocation5 + $0xe0] sm:$0xff]
    %v84 = vld [vmem:[#allocation5 + $0xe8] sm:$0xff]
    %v85 = vld [vmem:[#allocation5 + $0xf0] sm:$0xff]
    %v86 = vld [vmem:[#allocation5 + $0xf8] sm:$0xff]
    %v89 = vunpack.c.l.b16 %v53
    %v90 = vunpack.c.h.b16 %v53
    %v91 = vunpack.c.l.b16 %v54
    %v92 = vunpack.c.h.b16 %v54
    %v93 = vpack.c.b16 %v91, %v89
    %v94 = vpack.c.b16 %v92, %v90
    %v129 = vunpack.c.l.b16 %v55
    %v130 = vunpack.c.h.b16 %v55
    %v131 = vunpack.c.l.b16 %v56
    %v132 = vunpack.c.h.b16 %v56
    %v133 = vunpack.c.l.b16 %v57
    %v134 = vunpack.c.h.b16 %v57
    %v135 = vunpack.c.l.b16 %v58
    %v136 = vunpack.c.h.b16 %v58
    %v137 = vunpack.c.l.b16 %v59
    %v138 = vunpack.c.h.b16 %v59
    %v139 = vunpack.c.l.b16 %v60
    %v140 = vunpack.c.h.b16 %v60
    %v141 = vunpack.c.l.b16 %v61
    %v142 = vunpack.c.h.b16 %v61
    %v143 = vunpack.c.l.b16 %v62
    %v144 = vunpack.c.h.b16 %v62
    %v145 = vunpack.c.l.b16 %v63
    %v146 = vunpack.c.h.b16 %v63
    %v147 = vunpack.c.l.b16 %v64
    %v148 = vunpack.c.h.b16 %v64
    %v149 = vunpack.c.l.b16 %v65
    %v150 = vunpack.c.h.b16 %v65
    %v151 = vunpack.c.l.b16 %v66
    %v152 = vunpack.c.h.b16 %v66
    %v153 = vunpack.c.l.b16 %v67
    %v154 = vunpack.c.h.b16 %v67
    %v155 = vunpack.c.l.b16 %v68
    %v156 = vunpack.c.h.b16 %v68
    %v157 = vunpack.c.l.b16 %v69
    %v158 = vunpack.c.h.b16 %v69
    %v159 = vunpack.c.l.b16 %v70
    %v160 = vunpack.c.h.b16 %v70
    %v161 = vunpack.c.l.b16 %v71
    %v162 = vunpack.c.h.b16 %v71
    %v163 = vunpack.c.l.b16 %v72
    %v164 = vunpack.c.h.b16 %v72
    %v165 = vunpack.c.l.b16 %v73
    %v166 = vunpack.c.h.b16 %v73
    %v167 = vunpack.c.l.b16 %v74
    %v168 = vunpack.c.h.b16 %v74
    %v169 = vunpack.c.l.b16 %v75
    %v170 = vunpack.c.h.b16 %v75
    %v171 = vunpack.c.l.b16 %v76
    %v172 = vunpack.c.h.b16 %v76
    %v173 = vunpack.c.l.b16 %v77
    %v174 = vunpack.c.h.b16 %v77
    %v175 = vunpack.c.l.b16 %v78
    %v176 = vunpack.c.h.b16 %v78
    %v177 = vunpack.c.l.b16 %v79
    %v178 = vunpack.c.h.b16 %v79
    %v179 = vunpack.c.l.b16 %v80
    %v180 = vunpack.c.h.b16 %v80
    %v181 = vunpack.c.l.b16 %v81
    %v182 = vunpack.c.h.b16 %v81
    %v183 = vunpack.c.l.b16 %v82
    %v184 = vunpack.c.h.b16 %v82
    %v185 = vunpack.c.l.b16 %v83
    %v186 = vunpack.c.h.b16 %v83
    %v187 = vunpack.c.l.b16 %v84
    %v188 = vunpack.c.h.b16 %v84
    %v189 = vunpack.c.l.b16 %v85
    %v190 = vunpack.c.h.b16 %v85
    %v191 = vunpack.c.l.b16 %v86
    %v192 = vunpack.c.h.b16 %v86
    %v193 = vpack.c.b16 %v131, %v129
    %v194 = vpack.c.b16 %v132, %v130
    %v195 = vpack.c.b16 %v135, %v133
    %v196 = vpack.c.b16 %v136, %v134
    %v197 = vpack.c.b16 %v139, %v137
    %v198 = vpack.c.b16 %v140, %v138
    %v199 = vpack.c.b16 %v143, %v141
    %v200 = vpack.c.b16 %v144, %v142
    %v201 = vpack.c.b16 %v147, %v145
    %v202 = vpack.c.b16 %v148, %v146
    %v203 = vpack.c.b16 %v151, %v149
    %v204 = vpack.c.b16 %v152, %v150
    %v205 = vpack.c.b16 %v155, %v153
    %v206 = vpack.c.b16 %v156, %v154
    %v207 = vpack.c.b16 %v159, %v157
    %v208 = vpack.c.b16 %v160, %v158
    %v209 = vpack.c.b16 %v163, %v161
    %v210 = vpack.c.b16 %v164, %v162
    %v211 = vpack.c.b16 %v167, %v165
    %v212 = vpack.c.b16 %v168, %v166
    %v213 = vpack.c.b16 %v171, %v169
    %v214 = vpack.c.b16 %v172, %v170
    %v215 = vpack.c.b16 %v175, %v173
    %v216 = vpack.c.b16 %v176, %v174
    %v217 = vpack.c.b16 %v179, %v177
    %v218 = vpack.c.b16 %v180, %v178
    %v219 = vpack.c.b16 %v183, %v181
    %v220 = vpack.c.b16 %v184, %v182
    %v221 = vpack.c.b16 %v187, %v185
    %v222 = vpack.c.b16 %v188, %v186
    %v223 = vpack.c.b16 %v191, %v189
    %v224 = vpack.c.b16 %v192, %v190
    %257 = vmatprep.subr.bf16.mxu0 %v208
    %258 = vmatpush1.bf16.msra.mxu0 %v207
    %259 = vmatprep.subr.bf16.mxu0 %v206
    %260 = vmatpush1.bf16.msra.mxu0 %v205
    %261 = vmatprep.subr.bf16.mxu0 %v204
    %262 = vmatpush1.bf16.msra.mxu0 %v203
    %263 = vmatprep.subr.bf16.mxu0 %v202
    %264 = vmatpush1.bf16.msra.mxu0 %v201
    %265 = vmatprep.subr.bf16.mxu0 %v200
    %266 = vmatpush1.bf16.msra.mxu0 %v199
    %267 = vmatprep.subr.bf16.mxu0 %v198
    %268 = vmatpush1.bf16.msra.mxu0 %v197
    %269 = vmatprep.subr.bf16.mxu0 %v196
    %270 = vmatpush1.bf16.msra.mxu0 %v195
    %271 = vmatprep.subr.bf16.mxu0 %v194
    %272 = vmatpush1.bf16.msra.mxu0 %v193
    %273 = vmatprep.subr.bf16.mxu0 %v224
    %274 = vmatpush2.bf16.msra.mxu0 %v223
    %275 = vmatprep.subr.bf16.mxu0 %v222
    %276 = vmatpush2.bf16.msra.mxu0 %v221
    %277 = vmatprep.subr.bf16.mxu0 %v220
    %278 = vmatpush2.bf16.msra.mxu0 %v219
    %279 = vmatprep.subr.bf16.mxu0 %v218
    %280 = vmatpush2.bf16.msra.mxu0 %v217
    %281 = vmatprep.subr.bf16.mxu0 %v216
    %282 = vmatpush2.bf16.msra.mxu0 %v215
    %283 = vmatprep.subr.bf16.mxu0 %v214
    %284 = vmatpush2.bf16.msra.mxu0 %v213
    %285 = vmatprep.subr.bf16.mxu0 %v212
    %286 = vmatpush2.bf16.msra.mxu0 %v211
    %287 = vmatprep.subr.bf16.mxu0 %v210
    %288 = vmatpush2.bf16.msra.mxu0 %v209
    %289 = vmatprep.mubr.bf16.mxu0 %v94
    %290 = vmatmul.mubr.bf16.gmra.mxu0 %v93
    %v291 = vpop.f32.mrf.mxu0
    %v292 = vadd.f32 0.0, %v291
    %v293 = vpop.f32.mrf.mxu0
    %v294 = vadd.f32 0.0, %v293
    %v295 = vpop.f32.mrf.mxu0
    %v296 = vadd.f32 0.0, %v295
    %v297 = vpop.f32.mrf.mxu0
    %v298 = vadd.f32 0.0, %v297
    %299 = vdwg.mxu0
    %v300 = vadd.f32 %v49, %v292
    %v301 = vadd.f32 %v50, %v294
    %v302 = vadd.f32 %v51, %v296
    %v303 = vadd.f32 %v52, %v298
    %304 = vst [vmem:[#allocation2] sm:$0xff] %v300
    %305 = vst [vmem:[#allocation2 + $0x8] sm:$0xff] %v301
    %306 = vst [vmem:[#allocation2 + $0x10] sm:$0xff] %v302
    %307 = vst [vmem:[#allocation2 + $0x18] sm:$0xff] %v303
    // Predicated region
    $region22: #{_encoder_forward.2} parent=1 // pred_check
      %p308 = pneg %p41
    $region23: #{_encoder_forward.2} parent=1 // pred_check_branch
      %310 = sbr.rel (%p308) target = $region25
    $region24: #{_encoder_forward.2} parent=1 // pred_region
      %v311 = vld [vmem:[#allocation2] sm:$0xff]
      %v312 = vld [vmem:[#allocation2 + $0x8] sm:$0xff]
      %v313 = vld [vmem:[#allocation2 + $0x10] sm:$0xff]
      %v314 = vld [vmem:[#allocation2 + $0x18] sm:$0xff]
      %v315 = vpack.c.bf16 %v313, %v311
      %v316 = vpack.c.bf16 %v314, %v312
      %v319 = vunpack.c.l.b16 %v315
      %v320 = vunpack.c.l.b16 %v316
      %v321 = vunpack.c.h.b16 %v315
      %v322 = vunpack.c.h.b16 %v316
      %v323 = vpack.c.b16 %v320, %v319
      %v324 = vpack.c.b16 %v322, %v321
      %327 = vst [vmem:[%s2] sm:$0xff] %v323
      %328 = vst [vmem:[%s2 + $0x8] sm:$0xff] %v324
      %v329 = vmul.f32 %v311, %v311
      %v330 = vmul.f32 %v312, %v312
      %v331 = vmul.f32 %v313, %v313
      %v332 = vmul.f32 %v314, %v314
      %v333 = vadd.f32 %v329, %v331
      %v334 = vrot.slane %v333, 4
      %v335 = vadd.f32 %v333, %v334
      %v336 = vrot.slane %v335, 2
      %v337 = vadd.f32 %v335, %v336
      %v338 = vrot.slane %v337, 1
      %v339 = vadd.f32 %v337, %v338
      %v340 = vadd.f32 %v330, %v332
      %v341 = vrot.slane %v340, 4
      %v342 = vadd.f32 %v340, %v341
      %v343 = vrot.slane %v342, 2
      %v344 = vadd.f32 %v342, %v343
      %v345 = vrot.slane %v344, 1
      %v346 = vadd.f32 %v344, %v345
      %v349 = vcombine.low %v339, %v346
      %v351 = vunpack.c.l.s4 1966171168
      %v352 = vunpack.c.0.s8 %v351
      %v353 = vlaneseq
      %v354 = vshrl.u32 %v353, 7
      %v355 = vsub.s32 %v352, %v354
      %v356 = vrot.slane %v349, %v355
      %v358 = vunpack.c.l.s4 1966171168
      %v359 = vunpack.c.0.s8 %v358
      %v360 = vlaneseq
      %v361 = vshrl.u32 %v360, 7
      %v362 = vsub.s32 %v359, %v361
      %v363 = vrot.slane %v356, %v362
      %v365 = vlaneseq
      %vm366 = vcmp.ge.s32.totalorder %v365, 0
      %vm367 = vcmp.lt.s32.totalorder %v365, 256
      %vm368 = vmand %vm366, %vm367
      %369 = vst.msk [vmem:[%s3] sm:$0x3] %vm368, %v363
    $region25: #{_encoder_forward.2} parent=1 // pred_fallthru
      _
    // Predicated region
    $region26: #{_encoder_forward.2} parent=1 // pred_check
      _
    $region27: #{_encoder_forward.2} parent=1 // pred_check_branch
      %371 = sbr.rel (0) target = $region29
    $region28: #{_encoder_forward.2} parent=1 // pred_region
      _
    $region29: #{_encoder_forward.2} parent=1 // pred_fallthru
      _
    // Predicated region
    $region30: #{_encoder_forward.2} parent=1 // pred_check
      _
    $region31: #{_encoder_forward.2} parent=1 // pred_check_branch
      %373 = sbr.rel (0) target = $region33
    $region32: #{_encoder_forward.2} parent=1 // pred_region
      _
    $region33: #{_encoder_forward.2} parent=1 // pred_fallthru
      _
    // Predicated region
    $region34: #{_encoder_forward.2} parent=1 // pred_check
      _
    $region35: #{_encoder_forward.2} parent=1 // pred_check_branch
      %375 = sbr.rel (0) target = $region37
    $region36: #{_encoder_forward.2} parent=1 // pred_region
      _
    $region37: #{_encoder_forward.2} parent=1 // pred_fallthru
      _
    // Predicated region
    $region38: #{_encoder_forward.2} parent=1 // pred_check
      _
    $region39: #{_encoder_forward.2} parent=1 // pred_check_branch
      %377 = sbr.rel (0) target = $region41
    $region40: #{_encoder_forward.2} parent=1 // pred_region
      _
    $region41: #{_encoder_forward.2} parent=1 // pred_fallthru
      _
    %378 = vsyncpa [#allocation4], 1
    %379 = vsyncpa [#allocation6], 1

</llo_original>
